<compile_context>
chip_gen: v7x
topology: tpu7x:2x2x1
jax: 0.10.0
libtpu: 0.0.40
codegen_flags: <defaults>
</compile_context>

<pallas_src>
import jax
import jax.numpy as jnp
from jax.experimental import pallas as pl
from jax.experimental.pallas import tpu as pltpu

C_IN = 3
C_OUT = 512
KSIZE = 3
STRIDE = 2
PAD = 1

TM_TARGET = 2048  # M-tile (lane) width; double-buffered output tile = 4 MiB


def _fused_conv_kernel(p_ref, wt_ref, b_ref, o_ref):
    # p:  (K, TM)      summed im2col patches, M on the lane axis
    # wt: (C_OUT, K)   transposed conv weight (resident across all tiles)
    # b:  (C_OUT, 1)   2 * bias (bias is counted twice in the reference)
    # o:  (C_OUT, TM)  lane-dense output tile
    o_ref[...] = (
        jnp.dot(wt_ref[...], p_ref[...], preferred_element_type=jnp.float32)
        + b_ref[...]
    )


def _im2col(x_nhwc):
    """x_nhwc: (1, H, W, C) -> patches (1, H_out, W_out, K*K*C)."""
    _, h, w, _ = x_nhwc.shape
    xp = jnp.pad(x_nhwc, ((0, 0), (PAD, PAD), (PAD, PAD), (0, 0)))
    h_out = (h + 2 * PAD - KSIZE) // STRIDE + 1
    w_out = (w + 2 * PAD - KSIZE) // STRIDE + 1
    cols = []
    for dh in range(KSIZE):
        for dw in range(KSIZE):
            cols.append(xp[:, dh:dh + STRIDE * h_out:STRIDE,
                              dw:dw + STRIDE * w_out:STRIDE, :])
    return jnp.concatenate(cols, axis=-1), h_out, w_out


def trt_adapter_forward(img_nchw, w_hwio, bias):
    """img_nchw: (1, 3, H, W) float32 -> (1, 512, H/2, W/2) float32."""
    _, c, _, _ = img_nchw.shape
    x = jnp.transpose(img_nchw, (0, 2, 3, 1))                # NHWC

    # Patch matrices for the image and its W-flipped copy.  The output-space
    # W flip of f2 is a strided reverse of the W_out axis (no gather), and by
    # linearity the two matmuls collapse into one: (P1 + P2_rev) @ W + 2*b.
    p1, h_out, w_out = _im2col(x)
    p2, _, _ = _im2col(x[:, :, ::-1, :])
    p2 = p2[:, :, ::-1, :]
    p_sum = p1 + p2                                          # (1, H', W', 27)

    m = h_out * w_out
    k = KSIZE * KSIZE * c

    # Present patches transposed (K, M) so the kernel emits a (512, M) slab:
    # lane-dense output and a free reshape back to NCHW.
    p_kt = p_sum.reshape(m, k).T                             # (K, M)

    # Tile M; pad to a multiple of the tile so every block is full.
    tm = min(TM_TARGET, pl.cdiv(m, 128) * 128)
    m_pad = pl.cdiv(m, tm) * tm
    if m_pad != m:
        p_kt = jnp.pad(p_kt, ((0, 0), (0, m_pad - m)))

    w_t = w_hwio.reshape(k, C_OUT).T                         # (C_OUT, K)
    b2 = (2.0 * bias).reshape(C_OUT, 1)                      # bias added twice

    out_t = pl.pallas_call(
        _fused_conv_kernel,
        out_shape=jax.ShapeDtypeStruct((C_OUT, m_pad), jnp.float32),
        grid_spec=pltpu.PrefetchScalarGridSpec(
            num_scalar_prefetch=0,
            grid=(m_pad // tm,),
            in_specs=[
                pl.BlockSpec((k, tm), lambda i: (0, i)),       # patch tile
                pl.BlockSpec((C_OUT, k), lambda i: (0, 0)),    # weights (resident)
                pl.BlockSpec((C_OUT, 1), lambda i: (0, 0)),    # 2*bias (resident)
            ],
            out_specs=pl.BlockSpec((C_OUT, tm), lambda i: (0, i)),
        ),
        compiler_params=pltpu.CompilerParams(
            dimension_semantics=("parallel",),
            vmem_limit_bytes=32 * 1024 * 1024,
        ),
        cost_estimate=pl.CostEstimate(
            flops=2 * m_pad * k * C_OUT,
            transcendentals=0,
            bytes_accessed=4 * (k * m_pad + C_OUT * k + C_OUT + C_OUT * m_pad),
        ),
    )(p_kt, w_t, b2)

    out_t = out_t[:, :m] if m_pad != m else out_t            # drop M padding
    return out_t.reshape(1, C_OUT, h_out, w_out)             # free NCHW reshape


def _ref_infer(x_nchw, w_hwio, bias):
    """Pure-JAX reference for the synthetic 'engine' (conv 3x3, stride 2)."""
    x = jnp.transpose(x_nchw, (0, 2, 3, 1))
    y = jax.lax.conv_general_dilated(
        x, w_hwio, window_strides=(STRIDE, STRIDE),
        padding=((PAD, PAD), (PAD, PAD)),
        dimension_numbers=("NHWC", "HWIO", "NHWC"))
    y = y + bias
    return jnp.transpose(y, (0, 3, 1, 2))


if __name__ == "__main__":
    key = jax.random.PRNGKey(0)
    k1, k2, k3 = jax.random.split(key, 3)

    H = W = 16
    img = jax.random.normal(k1, (1, C_IN, H, W), dtype=jnp.float32)
    # Deterministic synthetic "engine" parameters.
    w_hwio = jax.random.normal(
        k2, (KSIZE, KSIZE, C_IN, C_OUT), dtype=jnp.float32) * 0.05
    bias = jax.random.normal(k3, (C_OUT,), dtype=jnp.float32) * 0.01

    out = trt_adapter_forward(img, w_hwio, bias)
    out = jax.block_until_ready(out)

    # Reference: infer(img) + flip_W(infer(flip_W(img)))
    ref1 = _ref_infer(img, w_hwio, bias)
    ref2 = _ref_infer(img[:, :, :, ::-1], w_hwio, bias)[:, :, :, ::-1]
    ref = ref1 + ref2

    assert out.shape == (1, C_OUT, H // 2, W // 2), out.shape
    assert out.dtype == jnp.float32
    assert jnp.allclose(out, ref, rtol=1e-4, atol=1e-4)

    print("KERNEL_OK")
</pallas_src>

<mosaic_0001>
module attributes {stable_mosaic.version = 11 : i64} {
  func.func @_fused_conv_kernel(%arg0: i32, %arg1: memref<27x128xf32, #tpu.memory_space<vmem>>, %arg2: memref<512x27xf32, #tpu.memory_space<vmem>>, %arg3: memref<512x1xf32, #tpu.memory_space<vmem>>, %arg4: memref<512x128xf32, #tpu.memory_space<vmem>>) attributes {dimension_semantics = [#tpu.dimension_semantics<parallel>], iteration_bounds = array<i64: 1>, scalar_prefetch = 0 : i64, scratch_operands = 0 : i64, tpu.core_type = #tpu.core_type<tc>, window_params = [{transform_indices = @transform_0, window_bounds = array<i64: 27, 128>}, {pipeline_mode = #tpu.pipeline_mode<synchronous>, transform_indices = @transform_1, window_bounds = array<i64: 512, 27>}, {pipeline_mode = #tpu.pipeline_mode<synchronous>, transform_indices = @transform_2, window_bounds = array<i64: 512, 1>}, {transform_indices = @transform_3, window_bounds = array<i64: 512, 128>}]} {
    %c0 = arith.constant 0 : index
    %c0_0 = arith.constant 0 : index
    %0 = vector.load %arg2[%c0, %c0_0] : memref<512x27xf32, #tpu.memory_space<vmem>>, vector<512x27xf32>
    %c0_1 = arith.constant 0 : index
    %c0_2 = arith.constant 0 : index
    %1 = vector.load %arg1[%c0_1, %c0_2] : memref<27x128xf32, #tpu.memory_space<vmem>>, vector<27x128xf32>
    %cst = arith.constant dense<0.000000e+00> : vector<512x128xf32>
    %2 = tpu.matmul %0, %1, %cst {dimension_numbers = #tpu.dot_dimension_numbers<[1], [0], [0], [1], [0, 0, 1, 1], [], []>} : vector<512x27xf32>, vector<27x128xf32>, vector<512x128xf32> -> vector<512x128xf32>
    %c0_3 = arith.constant 0 : index
    %c0_4 = arith.constant 0 : index
    %3 = vector.load %arg3[%c0_3, %c0_4] : memref<512x1xf32, #tpu.memory_space<vmem>>, vector<512x1xf32>
    %4 = vector.broadcast %3 : vector<512x1xf32> to vector<512x128xf32>
    %5 = arith.addf %2, %4 : vector<512x128xf32>
    %c0_5 = arith.constant 0 : index
    %c0_6 = arith.constant 0 : index
    %6 = vector.load %arg4[%c0_5, %c0_6] : memref<512x128xf32, #tpu.memory_space<vmem>>, vector<512x128xf32>
    tpu.vector_store %arg4[%c0_5, %c0_6], %5 {strides = array<i32>} : memref<512x128xf32, #tpu.memory_space<vmem>>, vector<512x128xf32>,
    return
  }
  func.func @transform_0(%arg0: i32) -> (i32, i32) {
    %c0_i32 = arith.constant 0 : i32
    %c0_i32_0 = arith.constant 0 : i32
    return %c0_i32, %arg0 : i32, i32
  }
  func.func @transform_1(%arg0: i32) -> (i32, i32) {
    %c0_i32 = arith.constant 0 : i32
    %c0_i32_0 = arith.constant 0 : i32
    %c0_i32_1 = arith.constant 0 : i32
    return %c0_i32, %c0_i32_0 : i32, i32
  }
  func.func @transform_2(%arg0: i32) -> (i32, i32) {
    %c0_i32 = arith.constant 0 : i32
    %c0_i32_0 = arith.constant 0 : i32
    %c0_i32_1 = arith.constant 0 : i32
    return %c0_i32, %c0_i32_0 : i32, i32
  }
  func.func @transform_3(%arg0: i32) -> (i32, i32) {
    %c0_i32 = arith.constant 0 : i32
    %c0_i32_0 = arith.constant 0 : i32
    return %c0_i32, %arg0 : i32, i32
  }
}

</mosaic_0001>

<llo_original>
// kernel: tpu_custom_call.1
$region0: #{tpu_custom_call.1}
  #allocation0 [shape = 'u32[]', space=smem, size = 0x4, offset = 0x4, fixed_abs, tag = 'smem constant byte address 0x4 - core index']
  #allocation1 [shape = 'u32[144,128]{1,0:T(1,128)}', space=vmem, size = 0x12000, scoped, tag = 'internal scratch']
  %s0 = inlined_call_operand.vmem [shape: f32[27,128], index: 0, kind: input, shape index: {}]
  %s1 = inlined_call_operand.vmem [shape: f32[512,27], index: 1, kind: input, shape index: {}]
  %s2 = inlined_call_operand.vmem [shape: f32[512,1], index: 2, kind: input, shape index: {}]
  %s3 = inlined_call_operand.hbm [shape: f32[512,128], index: 3, kind: output, shape index: {}]
  %s4 = sld [smem:[#allocation0]]
  $region22: #{tpu_custom_call.1} parent=0
    _
  %s6 = ssub.s32 1, %s4
  %s7 = scalar_select 0, %s6, %s4
  $region1: #{tpu_custom_call.1} parent=0
    #allocation2 [shape = 'u8[262144]{0}', space=vmem, size = 0x40000, scoped, tag = 'output window, operand 0, single buffered']
    #allocation3 [shape = 's32[1]{0}', space=sflag, size = 0x4, scoped, tag = 'scoped memory for tpu_custom_call.1']
    %8 = vsyncpa [#allocation3], 0
    // Predicated region
    $region2: #{tpu_custom_call.1} parent=1 // pred_check
      _
    $region3: #{tpu_custom_call.1} parent=1 // pred_check_branch
      %10 = sbr.rel (0) target = $region5
    $region4: #{tpu_custom_call.1} parent=1 // pred_region
      _
    $region5: #{tpu_custom_call.1} parent=1 // pred_fallthru
      _
    // Predicated region
    $region6: #{tpu_custom_call.1} parent=1 // pred_check
      _
    $region7: #{tpu_custom_call.1} parent=1 // pred_check_branch
      %12 = sbr.rel (0) target = $region9
    $region8: #{tpu_custom_call.1} parent=1 // pred_region
      _
    $region9: #{tpu_custom_call.1} parent=1 // pred_fallthru
      _
    // Predicated region
    $region10: #{tpu_custom_call.1} parent=1 // pred_check
      _
    $region11: #{tpu_custom_call.1} parent=1 // pred_check_branch
      %14 = sbr.rel (0) target = $region13
    $region12: #{tpu_custom_call.1} parent=1 // pred_region
      _
    $region13: #{tpu_custom_call.1} parent=1 // pred_fallthru
      _
    %v15 = vld [vmem:[%s1] sm:$0xff]
    %v16 = vld [vmem:[%s1 + $0x8] sm:$0xff]
    %v17 = vld [vmem:[%s1 + $0x10] sm:$0xff]
    %v18 = vld [vmem:[%s1 + $0x18] sm:$0xff]
    %v19 = vld [vmem:[%s1 + $0x20] sm:$0xff]
    %v20 = vld [vmem:[%s1 + $0x28] sm:$0xff]
    %v21 = vld [vmem:[%s1 + $0x30] sm:$0xff]
    %v22 = vld [vmem:[%s1 + $0x38] sm:$0xff]
    %v23 = vld [vmem:[%s1 + $0x40] sm:$0xff]
    %v24 = vld [vmem:[%s1 + $0x48] sm:$0xff]
    %v25 = vld [vmem:[%s1 + $0x50] sm:$0xff]
    %v26 = vld [vmem:[%s1 + $0x58] sm:$0xff]
    %v27 = vld [vmem:[%s1 + $0x60] sm:$0xff]
    %v28 = vld [vmem:[%s1 + $0x68] sm:$0xff]
    %v29 = vld [vmem:[%s1 + $0x70] sm:$0xff]
    %v30 = vld [vmem:[%s1 + $0x78] sm:$0xff]
    %v31 = vld [vmem:[%s1 + $0x80] sm:$0xff]
    %v32 = vld [vmem:[%s1 + $0x88] sm:$0xff]
    %v33 = vld [vmem:[%s1 + $0x90] sm:$0xff]
    %v34 = vld [vmem:[%s1 + $0x98] sm:$0xff]
    %v35 = vld [vmem:[%s1 + $0xa0] sm:$0xff]
    %v36 = vld [vmem:[%s1 + $0xa8] sm:$0xff]
    %v37 = vld [vmem:[%s1 + $0xb0] sm:$0xff]
    %v38 = vld [vmem:[%s1 + $0xb8] sm:$0xff]
    %v39 = vld [vmem:[%s1 + $0xc0] sm:$0xff]
    %v40 = vld [vmem:[%s1 + $0xc8] sm:$0xff]
    %v41 = vld [vmem:[%s1 + $0xd0] sm:$0xff]
    %v42 = vld [vmem:[%s1 + $0xd8] sm:$0xff]
    %v43 = vld [vmem:[%s1 + $0xe0] sm:$0xff]
    %v44 = vld [vmem:[%s1 + $0xe8] sm:$0xff]
    %v45 = vld [vmem:[%s1 + $0xf0] sm:$0xff]
    %v46 = vld [vmem:[%s1 + $0xf8] sm:$0xff]
    %v47 = vld [vmem:[%s1 + $0x100] sm:$0xff]
    %v48 = vld [vmem:[%s1 + $0x108] sm:$0xff]
    %v49 = vld [vmem:[%s1 + $0x110] sm:$0xff]
    %v50 = vld [vmem:[%s1 + $0x118] sm:$0xff]
    %v51 = vld [vmem:[%s1 + $0x120] sm:$0xff]
    %v52 = vld [vmem:[%s1 + $0x128] sm:$0xff]
    %v53 = vld [vmem:[%s1 + $0x130] sm:$0xff]
    %v54 = vld [vmem:[%s1 + $0x138] sm:$0xff]
    %v55 = vld [vmem:[%s1 + $0x140] sm:$0xff]
    %v56 = vld [vmem:[%s1 + $0x148] sm:$0xff]
    %v57 = vld [vmem:[%s1 + $0x150] sm:$0xff]
    %v58 = vld [vmem:[%s1 + $0x158] sm:$0xff]
    %v59 = vld [vmem:[%s1 + $0x160] sm:$0xff]
    %v60 = vld [vmem:[%s1 + $0x168] sm:$0xff]
    %v61 = vld [vmem:[%s1 + $0x170] sm:$0xff]
    %v62 = vld [vmem:[%s1 + $0x178] sm:$0xff]
    %v63 = vld [vmem:[%s1 + $0x180] sm:$0xff]
    %v64 = vld [vmem:[%s1 + $0x188] sm:$0xff]
    %v65 = vld [vmem:[%s1 + $0x190] sm:$0xff]
    %v66 = vld [vmem:[%s1 + $0x198] sm:$0xff]
    %v67 = vld [vmem:[%s1 + $0x1a0] sm:$0xff]
    %v68 = vld [vmem:[%s1 + $0x1a8] sm:$0xff]
    %v69 = vld [vmem:[%s1 + $0x1b0] sm:$0xff]
    %v70 = vld [vmem:[%s1 + $0x1b8] sm:$0xff]
    %v71 = vld [vmem:[%s1 + $0x1c0] sm:$0xff]
    %v72 = vld [vmem:[%s1 + $0x1c8] sm:$0xff]
    %v73 = vld [vmem:[%s1 + $0x1d0] sm:$0xff]
    %v74 = vld [vmem:[%s1 + $0x1d8] sm:$0xff]
    %v75 = vld [vmem:[%s1 + $0x1e0] sm:$0xff]
    %v76 = vld [vmem:[%s1 + $0x1e8] sm:$0xff]
    %v77 = vld [vmem:[%s1 + $0x1f0] sm:$0xff]
    %v78 = vld [vmem:[%s1 + $0x1f8] sm:$0xff]
    %v79 = vld [vmem:[%s0] sm:$0xff]
    %v80 = vld [vmem:[%s0 + $0x8] sm:$0xff]
    %v81 = vld [vmem:[%s0 + $0x10] sm:$0xff]
    %v82 = vld [vmem:[%s0 + $0x18] sm:$0x7]
    %v83 = vld [vmem:[%s2] sm:$0xff]
    %v84 = vld [vmem:[%s2 + $0x8] sm:$0xff]
    %v85 = vld [vmem:[%s2 + $0x10] sm:$0xff]
    %v86 = vld [vmem:[%s2 + $0x18] sm:$0xff]
    %v87 = vld [vmem:[%s2 + $0x20] sm:$0xff]
    %v88 = vld [vmem:[%s2 + $0x28] sm:$0xff]
    %v89 = vld [vmem:[%s2 + $0x30] sm:$0xff]
    %v90 = vld [vmem:[%s2 + $0x38] sm:$0xff]
    %v91 = vld [vmem:[%s2 + $0x40] sm:$0xff]
    %v92 = vld [vmem:[%s2 + $0x48] sm:$0xff]
    %v93 = vld [vmem:[%s2 + $0x50] sm:$0xff]
    %v94 = vld [vmem:[%s2 + $0x58] sm:$0xff]
    %v95 = vld [vmem:[%s2 + $0x60] sm:$0xff]
    %v96 = vld [vmem:[%s2 + $0x68] sm:$0xff]
    %v97 = vld [vmem:[%s2 + $0x70] sm:$0xff]
    %v98 = vld [vmem:[%s2 + $0x78] sm:$0xff]
    %v99 = vld [vmem:[%s2 + $0x80] sm:$0xff]
    %v100 = vld [vmem:[%s2 + $0x88] sm:$0xff]
    %v101 = vld [vmem:[%s2 + $0x90] sm:$0xff]
    %v102 = vld [vmem:[%s2 + $0x98] sm:$0xff]
    %v103 = vld [vmem:[%s2 + $0xa0] sm:$0xff]
    %v104 = vld [vmem:[%s2 + $0xa8] sm:$0xff]
    %v105 = vld [vmem:[%s2 + $0xb0] sm:$0xff]
    %v106 = vld [vmem:[%s2 + $0xb8] sm:$0xff]
    %v107 = vld [vmem:[%s2 + $0xc0] sm:$0xff]
    %v108 = vld [vmem:[%s2 + $0xc8] sm:$0xff]
    %v109 = vld [vmem:[%s2 + $0xd0] sm:$0xff]
    %v110 = vld [vmem:[%s2 + $0xd8] sm:$0xff]
    %v111 = vld [vmem:[%s2 + $0xe0] sm:$0xff]
    %v112 = vld [vmem:[%s2 + $0xe8] sm:$0xff]
    %v113 = vld [vmem:[%s2 + $0xf0] sm:$0xff]
    %v114 = vld [vmem:[%s2 + $0xf8] sm:$0xff]
    %v115 = vld [vmem:[%s2 + $0x100] sm:$0xff]
    %v116 = vld [vmem:[%s2 + $0x108] sm:$0xff]
    %v117 = vld [vmem:[%s2 + $0x110] sm:$0xff]
    %v118 = vld [vmem:[%s2 + $0x118] sm:$0xff]
    %v119 = vld [vmem:[%s2 + $0x120] sm:$0xff]
    %v120 = vld [vmem:[%s2 + $0x128] sm:$0xff]
    %v121 = vld [vmem:[%s2 + $0x130] sm:$0xff]
    %v122 = vld [vmem:[%s2 + $0x138] sm:$0xff]
    %v123 = vld [vmem:[%s2 + $0x140] sm:$0xff]
    %v124 = vld [vmem:[%s2 + $0x148] sm:$0xff]
    %v125 = vld [vmem:[%s2 + $0x150] sm:$0xff]
    %v126 = vld [vmem:[%s2 + $0x158] sm:$0xff]
    %v127 = vld [vmem:[%s2 + $0x160] sm:$0xff]
    %v128 = vld [vmem:[%s2 + $0x168] sm:$0xff]
    %v129 = vld [vmem:[%s2 + $0x170] sm:$0xff]
    %v130 = vld [vmem:[%s2 + $0x178] sm:$0xff]
    %v131 = vld [vmem:[%s2 + $0x180] sm:$0xff]
    %v132 = vld [vmem:[%s2 + $0x188] sm:$0xff]
    %v133 = vld [vmem:[%s2 + $0x190] sm:$0xff]
    %v134 = vld [vmem:[%s2 + $0x198] sm:$0xff]
    %v135 = vld [vmem:[%s2 + $0x1a0] sm:$0xff]
    %v136 = vld [vmem:[%s2 + $0x1a8] sm:$0xff]
    %v137 = vld [vmem:[%s2 + $0x1b0] sm:$0xff]
    %v138 = vld [vmem:[%s2 + $0x1b8] sm:$0xff]
    %v139 = vld [vmem:[%s2 + $0x1c0] sm:$0xff]
    %v140 = vld [vmem:[%s2 + $0x1c8] sm:$0xff]
    %v141 = vld [vmem:[%s2 + $0x1d0] sm:$0xff]
    %v142 = vld [vmem:[%s2 + $0x1d8] sm:$0xff]
    %v143 = vld [vmem:[%s2 + $0x1e0] sm:$0xff]
    %v144 = vld [vmem:[%s2 + $0x1e8] sm:$0xff]
    %v145 = vld [vmem:[%s2 + $0x1f0] sm:$0xff]
    %v146 = vld [vmem:[%s2 + $0x1f8] sm:$0xff]
    %148 = vset.pattern.permute.xlu0 0
    %149 = vperm.xlu0 %148, %v83
    %v150 = vpop.permute.xlu0 %149
    %153 = vset.pattern.permute.xlu0 0
    %154 = vperm.xlu0 %153, %v84
    %v155 = vpop.permute.xlu0 %154
    %158 = vset.pattern.permute.xlu0 0
    %159 = vperm.xlu0 %158, %v85
    %v160 = vpop.permute.xlu0 %159
    %163 = vset.pattern.permute.xlu0 0
    %164 = vperm.xlu0 %163, %v86
    %v165 = vpop.permute.xlu0 %164
    %168 = vset.pattern.permute.xlu0 0
    %169 = vperm.xlu0 %168, %v87
    %v170 = vpop.permute.xlu0 %169
    %173 = vset.pattern.permute.xlu0 0
    %174 = vperm.xlu0 %173, %v88
    %v175 = vpop.permute.xlu0 %174
    %178 = vset.pattern.permute.xlu0 0
    %179 = vperm.xlu0 %178, %v89
    %v180 = vpop.permute.xlu0 %179
    %183 = vset.pattern.permute.xlu0 0
    %184 = vperm.xlu0 %183, %v90
    %v185 = vpop.permute.xlu0 %184
    %188 = vset.pattern.permute.xlu0 0
    %189 = vperm.xlu0 %188, %v91
    %v190 = vpop.permute.xlu0 %189
    %193 = vset.pattern.permute.xlu0 0
    %194 = vperm.xlu0 %193, %v92
    %v195 = vpop.permute.xlu0 %194
    %198 = vset.pattern.permute.xlu0 0
    %199 = vperm.xlu0 %198, %v93
    %v200 = vpop.permute.xlu0 %199
    %203 = vset.pattern.permute.xlu0 0
    %204 = vperm.xlu0 %203, %v94
    %v205 = vpop.permute.xlu0 %204
    %208 = vset.pattern.permute.xlu0 0
    %209 = vperm.xlu0 %208, %v95
    %v210 = vpop.permute.xlu0 %209
    %213 = vset.pattern.permute.xlu0 0
    %214 = vperm.xlu0 %213, %v96
    %v215 = vpop.permute.xlu0 %214
    %218 = vset.pattern.permute.xlu0 0
    %219 = vperm.xlu0 %218, %v97
    %v220 = vpop.permute.xlu0 %219
    %223 = vset.pattern.permute.xlu0 0
    %224 = vperm.xlu0 %223, %v98
    %v225 = vpop.permute.xlu0 %224
    %228 = vset.pattern.permute.xlu0 0
    %229 = vperm.xlu0 %228, %v99
    %v230 = vpop.permute.xlu0 %229
    %233 = vset.pattern.permute.xlu0 0
    %234 = vperm.xlu0 %233, %v100
    %v235 = vpop.permute.xlu0 %234
    %238 = vset.pattern.permute.xlu0 0
    %239 = vperm.xlu0 %238, %v101
    %v240 = vpop.permute.xlu0 %239
    %243 = vset.pattern.permute.xlu0 0
    %244 = vperm.xlu0 %243, %v102
    %v245 = vpop.permute.xlu0 %244
    %248 = vset.pattern.permute.xlu0 0
    %249 = vperm.xlu0 %248, %v103
    %v250 = vpop.permute.xlu0 %249
    %253 = vset.pattern.permute.xlu0 0
    %254 = vperm.xlu0 %253, %v104
    %v255 = vpop.permute.xlu0 %254
    %258 = vset.pattern.permute.xlu0 0
    %259 = vperm.xlu0 %258, %v105
    %v260 = vpop.permute.xlu0 %259
    %263 = vset.pattern.permute.xlu0 0
    %264 = vperm.xlu0 %263, %v106
    %v265 = vpop.permute.xlu0 %264
    %268 = vset.pattern.permute.xlu0 0
    %269 = vperm.xlu0 %268, %v107
    %v270 = vpop.permute.xlu0 %269
    %273 = vset.pattern.permute.xlu0 0
    %274 = vperm.xlu0 %273, %v108
    %v275 = vpop.permute.xlu0 %274
    %278 = vset.pattern.permute.xlu0 0
    %279 = vperm.xlu0 %278, %v109
    %v280 = vpop.permute.xlu0 %279
    %283 = vset.pattern.permute.xlu0 0
    %284 = vperm.xlu0 %283, %v110
    %v285 = vpop.permute.xlu0 %284
    %288 = vset.pattern.permute.xlu0 0
    %289 = vperm.xlu0 %288, %v111
    %v290 = vpop.permute.xlu0 %289
    %293 = vset.pattern.permute.xlu0 0
    %294 = vperm.xlu0 %293, %v112
    %v295 = vpop.permute.xlu0 %294
    %298 = vset.pattern.permute.xlu0 0
    %299 = vperm.xlu0 %298, %v113
    %v300 = vpop.permute.xlu0 %299
    %303 = vset.pattern.permute.xlu0 0
    %304 = vperm.xlu0 %303, %v114
    %v305 = vpop.permute.xlu0 %304
    %308 = vset.pattern.permute.xlu0 0
    %309 = vperm.xlu0 %308, %v115
    %v310 = vpop.permute.xlu0 %309
    %313 = vset.pattern.permute.xlu0 0
    %314 = vperm.xlu0 %313, %v116
    %v315 = vpop.permute.xlu0 %314
    %318 = vset.pattern.permute.xlu0 0
    %319 = vperm.xlu0 %318, %v117
    %v320 = vpop.permute.xlu0 %319
    %323 = vset.pattern.permute.xlu0 0
    %324 = vperm.xlu0 %323, %v118
    %v325 = vpop.permute.xlu0 %324
    %328 = vset.pattern.permute.xlu0 0
    %329 = vperm.xlu0 %328, %v119
    %v330 = vpop.permute.xlu0 %329
    %333 = vset.pattern.permute.xlu0 0
    %334 = vperm.xlu0 %333, %v120
    %v335 = vpop.permute.xlu0 %334
    %338 = vset.pattern.permute.xlu0 0
    %339 = vperm.xlu0 %338, %v121
    %v340 = vpop.permute.xlu0 %339
    %343 = vset.pattern.permute.xlu0 0
    %344 = vperm.xlu0 %343, %v122
    %v345 = vpop.permute.xlu0 %344
    %348 = vset.pattern.permute.xlu0 0
    %349 = vperm.xlu0 %348, %v123
    %v350 = vpop.permute.xlu0 %349
    %353 = vset.pattern.permute.xlu0 0
    %354 = vperm.xlu0 %353, %v124
    %v355 = vpop.permute.xlu0 %354
    %358 = vset.pattern.permute.xlu0 0
    %359 = vperm.xlu0 %358, %v125
    %v360 = vpop.permute.xlu0 %359
    %363 = vset.pattern.permute.xlu0 0
    %364 = vperm.xlu0 %363, %v126
    %v365 = vpop.permute.xlu0 %364
    %368 = vset.pattern.permute.xlu0 0
    %369 = vperm.xlu0 %368, %v127
    %v370 = vpop.permute.xlu0 %369
    %373 = vset.pattern.permute.xlu0 0
    %374 = vperm.xlu0 %373, %v128
    %v375 = vpop.permute.xlu0 %374
    %378 = vset.pattern.permute.xlu0 0
    %379 = vperm.xlu0 %378, %v129
    %v380 = vpop.permute.xlu0 %379
    %383 = vset.pattern.permute.xlu0 0
    %384 = vperm.xlu0 %383, %v130
    %v385 = vpop.permute.xlu0 %384
    %388 = vset.pattern.permute.xlu0 0
    %389 = vperm.xlu0 %388, %v131
    %v390 = vpop.permute.xlu0 %389
    %393 = vset.pattern.permute.xlu0 0
    %394 = vperm.xlu0 %393, %v132
    %v395 = vpop.permute.xlu0 %394
    %398 = vset.pattern.permute.xlu0 0
    %399 = vperm.xlu0 %398, %v133
    %v400 = vpop.permute.xlu0 %399
    %403 = vset.pattern.permute.xlu0 0
    %404 = vperm.xlu0 %403, %v134
    %v405 = vpop.permute.xlu0 %404
    %408 = vset.pattern.permute.xlu0 0
    %409 = vperm.xlu0 %408, %v135
    %v410 = vpop.permute.xlu0 %409
    %413 = vset.pattern.permute.xlu0 0
    %414 = vperm.xlu0 %413, %v136
    %v415 = vpop.permute.xlu0 %414
    %418 = vset.pattern.permute.xlu0 0
    %419 = vperm.xlu0 %418, %v137
    %v420 = vpop.permute.xlu0 %419
    %423 = vset.pattern.permute.xlu0 0
    %424 = vperm.xlu0 %423, %v138
    %v425 = vpop.permute.xlu0 %424
    %428 = vset.pattern.permute.xlu0 0
    %429 = vperm.xlu0 %428, %v139
    %v430 = vpop.permute.xlu0 %429
    %433 = vset.pattern.permute.xlu0 0
    %434 = vperm.xlu0 %433, %v140
    %v435 = vpop.permute.xlu0 %434
    %438 = vset.pattern.permute.xlu0 0
    %439 = vperm.xlu0 %438, %v141
    %v440 = vpop.permute.xlu0 %439
    %443 = vset.pattern.permute.xlu0 0
    %444 = vperm.xlu0 %443, %v142
    %v445 = vpop.permute.xlu0 %444
    %448 = vset.pattern.permute.xlu0 0
    %449 = vperm.xlu0 %448, %v143
    %v450 = vpop.permute.xlu0 %449
    %453 = vset.pattern.permute.xlu0 0
    %454 = vperm.xlu0 %453, %v144
    %v455 = vpop.permute.xlu0 %454
    %458 = vset.pattern.permute.xlu0 0
    %459 = vperm.xlu0 %458, %v145
    %v460 = vpop.permute.xlu0 %459
    %463 = vset.pattern.permute.xlu0 0
    %464 = vperm.xlu0 %463, %v146
    %v465 = vpop.permute.xlu0 %464
    %vm467 = vcmask 220160
    %v469 = vsel %vm467, %v15, 0
    %v472 = vsel %vm467, %v16, 0
    %v475 = vsel %vm467, %v17, 0
    %v478 = vsel %vm467, %v18, 0
    %v481 = vsel %vm467, %v19, 0
    %v484 = vsel %vm467, %v20, 0
    %v487 = vsel %vm467, %v21, 0
    %v490 = vsel %vm467, %v22, 0
    %v493 = vsel %vm467, %v23, 0
    %v496 = vsel %vm467, %v24, 0
    %v499 = vsel %vm467, %v25, 0
    %v502 = vsel %vm467, %v26, 0
    %v505 = vsel %vm467, %v27, 0
    %v508 = vsel %vm467, %v28, 0
    %v511 = vsel %vm467, %v29, 0
    %v514 = vsel %vm467, %v30, 0
    %v517 = vsel %vm467, %v31, 0
    %v520 = vsel %vm467, %v32, 0
    %v523 = vsel %vm467, %v33, 0
    %v526 = vsel %vm467, %v34, 0
    %v529 = vsel %vm467, %v35, 0
    %v532 = vsel %vm467, %v36, 0
    %v535 = vsel %vm467, %v37, 0
    %v538 = vsel %vm467, %v38, 0
    %v541 = vsel %vm467, %v39, 0
    %v544 = vsel %vm467, %v40, 0
    %v547 = vsel %vm467, %v41, 0
    %v550 = vsel %vm467, %v42, 0
    %v553 = vsel %vm467, %v43, 0
    %v556 = vsel %vm467, %v44, 0
    %v559 = vsel %vm467, %v45, 0
    %v562 = vsel %vm467, %v46, 0
    %v565 = vsel %vm467, %v47, 0
    %v568 = vsel %vm467, %v48, 0
    %v571 = vsel %vm467, %v49, 0
    %v574 = vsel %vm467, %v50, 0
    %v577 = vsel %vm467, %v51, 0
    %v580 = vsel %vm467, %v52, 0
    %v583 = vsel %vm467, %v53, 0
    %v586 = vsel %vm467, %v54, 0
    %v589 = vsel %vm467, %v55, 0
    %v592 = vsel %vm467, %v56, 0
    %v595 = vsel %vm467, %v57, 0
    %v598 = vsel %vm467, %v58, 0
    %v601 = vsel %vm467, %v59, 0
    %v604 = vsel %vm467, %v60, 0
    %v607 = vsel %vm467, %v61, 0
    %v610 = vsel %vm467, %v62, 0
    %v613 = vsel %vm467, %v63, 0
    %v616 = vsel %vm467, %v64, 0
    %v619 = vsel %vm467, %v65, 0
    %v622 = vsel %vm467, %v66, 0
    %v625 = vsel %vm467, %v67, 0
    %v628 = vsel %vm467, %v68, 0
    %v631 = vsel %vm467, %v69, 0
    %v634 = vsel %vm467, %v70, 0
    %v637 = vsel %vm467, %v71, 0
    %v640 = vsel %vm467, %v72, 0
    %v643 = vsel %vm467, %v73, 0
    %v646 = vsel %vm467, %v74, 0
    %v649 = vsel %vm467, %v75, 0
    %v652 = vsel %vm467, %v76, 0
    %v655 = vsel %vm467, %v77, 0
    %v658 = vsel %vm467, %v78, 0
    %vm660 = vcmask 1042432
    %v662 = vsel %vm660, %v82, 0
    %664 = vmatprep.subr.mxu0 0.0
    %665 = vmatpush1.msra.mxu0 %v79
    %666 = vmatprep.subr.mxu0 0.0
    %667 = vmatpush1.msra.mxu0 %v80
    %668 = vmatprep.subr.mxu0 0.0
    %669 = vmatpush1.msra.mxu0 %v81
    %670 = vmatprep.subr.mxu0 0.0
    %671 = vmatpush1.msra.mxu0 %v662
    %672 = vmatprep.subr.mxu0 0.0
    %673 = vmatpush1.msra.mxu0 0.0
    %674 = vmatprep.subr.mxu0 0.0
    %675 = vmatpush1.msra.mxu0 0.0
    %676 = vmatprep.subr.mxu0 0.0
    %677 = vmatpush1.msra.mxu0 0.0
    %678 = vmatprep.subr.mxu0 0.0
    %679 = vmatpush1.msra.mxu0 0.0
    %680 = vmatprep.subr.mxu0 0.0
    %681 = vmatpush1.msra.mxu0 0.0
    %682 = vmatprep.subr.mxu0 0.0
    %683 = vmatpush1.msra.mxu0 0.0
    %684 = vmatprep.subr.mxu0 0.0
    %685 = vmatpush1.msra.mxu0 0.0
    %686 = vmatprep.subr.mxu0 0.0
    %687 = vmatpush1.msra.mxu0 0.0
    %688 = vmatprep.subr.mxu0 0.0
    %689 = vmatpush1.msra.mxu0 0.0
    %690 = vmatprep.subr.mxu0 0.0
    %691 = vmatpush1.msra.mxu0 0.0
    %692 = vmatprep.subr.mxu0 0.0
    %693 = vmatpush1.msra.mxu0 0.0
    %694 = vmatprep.subr.mxu0 0.0
    %695 = vmatpush1.msra.mxu0 0.0
    %696 = vmatprep.subr.mxu0 0.0
    %697 = vmatpush1.msra.mxu0 0.0
    %698 = vmatprep.subr.mxu0 0.0
    %699 = vmatpush1.msra.mxu0 0.0
    %700 = vmatprep.subr.mxu0 0.0
    %701 = vmatpush1.msra.mxu0 0.0
    %702 = vmatprep.subr.mxu0 0.0
    %703 = vmatpush1.msra.mxu0 0.0
    %704 = vmatprep.subr.mxu0 0.0
    %705 = vmatpush1.msra.mxu0 0.0
    %706 = vmatprep.subr.mxu0 0.0
    %707 = vmatpush1.msra.mxu0 0.0
    %708 = vmatprep.subr.mxu0 0.0
    %709 = vmatpush1.msra.mxu0 0.0
    %710 = vmatprep.subr.mxu0 0.0
    %711 = vmatpush1.msra.mxu0 0.0
    %712 = vmatprep.subr.mxu0 0.0
    %713 = vmatpush1.msra.mxu0 0.0
    %714 = vmatprep.subr.mxu0 0.0
    %715 = vmatpush1.msra.mxu0 0.0
    %716 = vmatprep.subr.mxu0 0.0
    %717 = vmatpush1.msra.mxu0 0.0
    %718 = vmatprep.subr.mxu0 0.0
    %719 = vmatpush1.msra.mxu0 0.0
    %720 = vmatprep.subr.mxu0 0.0
    %721 = vmatpush1.msra.mxu0 0.0
    %722 = vmatprep.subr.mxu0 0.0
    %723 = vmatpush1.msra.mxu0 0.0
    %724 = vmatprep.subr.mxu0 0.0
    %725 = vmatpush1.msra.mxu0 0.0
    %726 = vmatprep.subr.mxu0 0.0
    %727 = vmatpush1.msra.mxu0 0.0
    %728 = vmatprep.mubr.f32.mxu0 0.0
    %729 = vmatmul.mubr.f32.gmra.mrb[0].mxu0 %v469
    %v730 = vpop.f32.mrb[0].mxu0
    %v731 = vadd.f32 %v150, %v730
    %v732 = vpop.f32.mrb[0].mxu0
    %733 = vmatprep.mubr.f32.mxu0 0.0
    %734 = vmatmul.mubr.f32.gmra.mrb[0].mxu0 %v472
    %v735 = vpop.f32.mrb[0].mxu0
    %v736 = vadd.f32 %v155, %v735
    %v737 = vpop.f32.mrb[0].mxu0
    %738 = vmatprep.mubr.f32.mxu0 0.0
    %739 = vmatmul.mubr.f32.gmra.mrb[0].mxu0 %v475
    %v740 = vpop.f32.mrb[0].mxu0
    %v741 = vadd.f32 %v160, %v740
    %v742 = vpop.f32.mrb[0].mxu0
    %743 = vmatprep.mubr.f32.mxu0 0.0
    %744 = vmatmul.mubr.f32.gmra.mrb[0].mxu0 %v478
    %v745 = vpop.f32.mrb[0].mxu0
    %v746 = vadd.f32 %v165, %v745
    %v747 = vpop.f32.mrb[0].mxu0
    %748 = vmatprep.mubr.f32.mxu0 0.0
    %749 = vmatmul.mubr.f32.gmra.mrb[0].mxu0 %v481
    %v750 = vpop.f32.mrb[0].mxu0
    %v751 = vadd.f32 %v170, %v750
    %v752 = vpop.f32.mrb[0].mxu0
    %753 = vmatprep.mubr.f32.mxu0 0.0
    %754 = vmatmul.mubr.f32.gmra.mrb[0].mxu0 %v484
    %v755 = vpop.f32.mrb[0].mxu0
    %v756 = vadd.f32 %v175, %v755
    %v757 = vpop.f32.mrb[0].mxu0
    %758 = vmatprep.mubr.f32.mxu0 0.0
    %759 = vmatmul.mubr.f32.gmra.mrb[0].mxu0 %v487
    %v760 = vpop.f32.mrb[0].mxu0
    %v761 = vadd.f32 %v180, %v760
    %v762 = vpop.f32.mrb[0].mxu0
    %763 = vmatprep.mubr.f32.mxu0 0.0
    %764 = vmatmul.mubr.f32.gmra.mrb[0].mxu0 %v490
    %v765 = vpop.f32.mrb[0].mxu0
    %v766 = vadd.f32 %v185, %v765
    %v767 = vpop.f32.mrb[0].mxu0
    %768 = vmatprep.mubr.f32.mxu0 0.0
    %769 = vmatmul.mubr.f32.gmra.mrb[0].mxu0 %v493
    %v770 = vpop.f32.mrb[0].mxu0
    %v771 = vadd.f32 %v190, %v770
    %v772 = vpop.f32.mrb[0].mxu0
    %773 = vmatprep.mubr.f32.mxu0 0.0
    %774 = vmatmul.mubr.f32.gmra.mrb[0].mxu0 %v496
    %v775 = vpop.f32.mrb[0].mxu0
    %v776 = vadd.f32 %v195, %v775
    %v777 = vpop.f32.mrb[0].mxu0
    %778 = vmatprep.mubr.f32.mxu0 0.0
    %779 = vmatmul.mubr.f32.gmra.mrb[0].mxu0 %v499
    %v780 = vpop.f32.mrb[0].mxu0
    %v781 = vadd.f32 %v200, %v780
    %v782 = vpop.f32.mrb[0].mxu0
    %783 = vmatprep.mubr.f32.mxu0 0.0
    %784 = vmatmul.mubr.f32.gmra.mrb[0].mxu0 %v502
    %v785 = vpop.f32.mrb[0].mxu0
    %v786 = vadd.f32 %v205, %v785
    %v787 = vpop.f32.mrb[0].mxu0
    %788 = vmatprep.mubr.f32.mxu0 0.0
    %789 = vmatmul.mubr.f32.gmra.mrb[0].mxu0 %v505
    %v790 = vpop.f32.mrb[0].mxu0
    %v791 = vadd.f32 %v210, %v790
    %v792 = vpop.f32.mrb[0].mxu0
    %793 = vmatprep.mubr.f32.mxu0 0.0
    %794 = vmatmul.mubr.f32.gmra.mrb[0].mxu0 %v508
    %v795 = vpop.f32.mrb[0].mxu0
    %v796 = vadd.f32 %v215, %v795
    %v797 = vpop.f32.mrb[0].mxu0
    %798 = vmatprep.mubr.f32.mxu0 0.0
    %799 = vmatmul.mubr.f32.gmra.mrb[0].mxu0 %v511
    %v800 = vpop.f32.mrb[0].mxu0
    %v801 = vadd.f32 %v220, %v800
    %v802 = vpop.f32.mrb[0].mxu0
    %803 = vmatprep.mubr.f32.mxu0 0.0
    %804 = vmatmul.mubr.f32.gmra.mrb[0].mxu0 %v514
    %v805 = vpop.f32.mrb[0].mxu0
    %v806 = vadd.f32 %v225, %v805
    %v807 = vpop.f32.mrb[0].mxu0
    %808 = vmatprep.mubr.f32.mxu0 0.0
    %809 = vmatmul.mubr.f32.gmra.mrb[0].mxu0 %v517
    %v810 = vpop.f32.mrb[0].mxu0
    %v811 = vadd.f32 %v230, %v810
    %v812 = vpop.f32.mrb[0].mxu0
    %813 = vmatprep.mubr.f32.mxu0 0.0
    %814 = vmatmul.mubr.f32.gmra.mrb[0].mxu0 %v520
    %v815 = vpop.f32.mrb[0].mxu0
    %v816 = vadd.f32 %v235, %v815
    %v817 = vpop.f32.mrb[0].mxu0
    %818 = vmatprep.mubr.f32.mxu0 0.0
    %819 = vmatmul.mubr.f32.gmra.mrb[0].mxu0 %v523
    %v820 = vpop.f32.mrb[0].mxu0
    %v821 = vadd.f32 %v240, %v820
    %v822 = vpop.f32.mrb[0].mxu0
    %823 = vmatprep.mubr.f32.mxu0 0.0
    %824 = vmatmul.mubr.f32.gmra.mrb[0].mxu0 %v526
    %v825 = vpop.f32.mrb[0].mxu0
    %v826 = vadd.f32 %v245, %v825
    %v827 = vpop.f32.mrb[0].mxu0
    %828 = vmatprep.mubr.f32.mxu0 0.0
    %829 = vmatmul.mubr.f32.gmra.mrb[0].mxu0 %v529
    %v830 = vpop.f32.mrb[0].mxu0
    %v831 = vadd.f32 %v250, %v830
    %v832 = vpop.f32.mrb[0].mxu0
    %833 = vmatprep.mubr.f32.mxu0 0.0
    %834 = vmatmul.mubr.f32.gmra.mrb[0].mxu0 %v532
    %v835 = vpop.f32.mrb[0].mxu0
    %v836 = vadd.f32 %v255, %v835
    %v837 = vpop.f32.mrb[0].mxu0
    %838 = vmatprep.mubr.f32.mxu0 0.0
    %839 = vmatmul.mubr.f32.gmra.mrb[0].mxu0 %v535
    %v840 = vpop.f32.mrb[0].mxu0
    %v841 = vadd.f32 %v260, %v840
    %v842 = vpop.f32.mrb[0].mxu0
    %843 = vmatprep.mubr.f32.mxu0 0.0
    %844 = vmatmul.mubr.f32.gmra.mrb[0].mxu0 %v538
    %v845 = vpop.f32.mrb[0].mxu0
    %v846 = vadd.f32 %v265, %v845
    %v847 = vpop.f32.mrb[0].mxu0
    %848 = vmatprep.mubr.f32.mxu0 0.0
    %849 = vmatmul.mubr.f32.gmra.mrb[0].mxu0 %v541
    %v850 = vpop.f32.mrb[0].mxu0
    %v851 = vadd.f32 %v270, %v850
    %v852 = vpop.f32.mrb[0].mxu0
    %853 = vmatprep.mubr.f32.mxu0 0.0
    %854 = vmatmul.mubr.f32.gmra.mrb[0].mxu0 %v544
    %v855 = vpop.f32.mrb[0].mxu0
    %v856 = vadd.f32 %v275, %v855
    %v857 = vpop.f32.mrb[0].mxu0
    %858 = vmatprep.mubr.f32.mxu0 0.0
    %859 = vmatmul.mubr.f32.gmra.mrb[0].mxu0 %v547
    %v860 = vpop.f32.mrb[0].mxu0
    %v861 = vadd.f32 %v280, %v860
    %v862 = vpop.f32.mrb[0].mxu0
    %863 = vmatprep.mubr.f32.mxu0 0.0
    %864 = vmatmul.mubr.f32.gmra.mrb[0].mxu0 %v550
    %v865 = vpop.f32.mrb[0].mxu0
    %v866 = vadd.f32 %v285, %v865
    %v867 = vpop.f32.mrb[0].mxu0
    %868 = vmatprep.mubr.f32.mxu0 0.0
    %869 = vmatmul.mubr.f32.gmra.mrb[0].mxu0 %v553
    %v870 = vpop.f32.mrb[0].mxu0
    %v871 = vadd.f32 %v290, %v870
    %v872 = vpop.f32.mrb[0].mxu0
    %873 = vmatprep.mubr.f32.mxu0 0.0
    %874 = vmatmul.mubr.f32.gmra.mrb[0].mxu0 %v556
    %v875 = vpop.f32.mrb[0].mxu0
    %v876 = vadd.f32 %v295, %v875
    %v877 = vpop.f32.mrb[0].mxu0
    %878 = vmatprep.mubr.f32.mxu0 0.0
    %879 = vmatmul.mubr.f32.gmra.mrb[0].mxu0 %v559
    %v880 = vpop.f32.mrb[0].mxu0
    %v881 = vadd.f32 %v300, %v880
    %v882 = vpop.f32.mrb[0].mxu0
    %883 = vmatprep.mubr.f32.mxu0 0.0
    %884 = vmatmul.mubr.f32.gmra.mrb[0].mxu0 %v562
    %v885 = vpop.f32.mrb[0].mxu0
    %v886 = vadd.f32 %v305, %v885
    %v887 = vpop.f32.mrb[0].mxu0
    %888 = vmatprep.mubr.f32.mxu0 0.0
    %889 = vmatmul.mubr.f32.gmra.mrb[0].mxu0 %v565
    %v890 = vpop.f32.mrb[0].mxu0
    %v891 = vadd.f32 %v310, %v890
    %v892 = vpop.f32.mrb[0].mxu0
    %893 = vmatprep.mubr.f32.mxu0 0.0
    %894 = vmatmul.mubr.f32.gmra.mrb[0].mxu0 %v568
    %v895 = vpop.f32.mrb[0].mxu0
    %v896 = vadd.f32 %v315, %v895
    %v897 = vpop.f32.mrb[0].mxu0
    %898 = vmatprep.mubr.f32.mxu0 0.0
    %899 = vmatmul.mubr.f32.gmra.mrb[0].mxu0 %v571
    %v900 = vpop.f32.mrb[0].mxu0
    %v901 = vadd.f32 %v320, %v900
    %v902 = vpop.f32.mrb[0].mxu0
    %903 = vmatprep.mubr.f32.mxu0 0.0
    %904 = vmatmul.mubr.f32.gmra.mrb[0].mxu0 %v574
    %v905 = vpop.f32.mrb[0].mxu0
    %v906 = vadd.f32 %v325, %v905
    %v907 = vpop.f32.mrb[0].mxu0
    %908 = vmatprep.mubr.f32.mxu0 0.0
    %909 = vmatmul.mubr.f32.gmra.mrb[0].mxu0 %v577
    %v910 = vpop.f32.mrb[0].mxu0
    %v911 = vadd.f32 %v330, %v910
    %v912 = vpop.f32.mrb[0].mxu0
    %913 = vmatprep.mubr.f32.mxu0 0.0
    %914 = vmatmul.mubr.f32.gmra.mrb[0].mxu0 %v580
    %v915 = vpop.f32.mrb[0].mxu0
    %v916 = vadd.f32 %v335, %v915
    %v917 = vpop.f32.mrb[0].mxu0
    %918 = vmatprep.mubr.f32.mxu0 0.0
    %919 = vmatmul.mubr.f32.gmra.mrb[0].mxu0 %v583
    %v920 = vpop.f32.mrb[0].mxu0
    %v921 = vadd.f32 %v340, %v920
    %v922 = vpop.f32.mrb[0].mxu0
    %923 = vmatprep.mubr.f32.mxu0 0.0
    %924 = vmatmul.mubr.f32.gmra.mrb[0].mxu0 %v586
    %v925 = vpop.f32.mrb[0].mxu0
    %v926 = vadd.f32 %v345, %v925
    %v927 = vpop.f32.mrb[0].mxu0
    %928 = vmatprep.mubr.f32.mxu0 0.0
    %929 = vmatmul.mubr.f32.gmra.mrb[0].mxu0 %v589
    %v930 = vpop.f32.mrb[0].mxu0
    %v931 = vadd.f32 %v350, %v930
    %v932 = vpop.f32.mrb[0].mxu0
    %933 = vmatprep.mubr.f32.mxu0 0.0
    %934 = vmatmul.mubr.f32.gmra.mrb[0].mxu0 %v592
    %v935 = vpop.f32.mrb[0].mxu0
    %v936 = vadd.f32 %v355, %v935
    %v937 = vpop.f32.mrb[0].mxu0
    %938 = vmatprep.mubr.f32.mxu0 0.0
    %939 = vmatmul.mubr.f32.gmra.mrb[0].mxu0 %v595
    %v940 = vpop.f32.mrb[0].mxu0
    %v941 = vadd.f32 %v360, %v940
    %v942 = vpop.f32.mrb[0].mxu0
    %943 = vmatprep.mubr.f32.mxu0 0.0
    %944 = vmatmul.mubr.f32.gmra.mrb[0].mxu0 %v598
    %v945 = vpop.f32.mrb[0].mxu0
    %v946 = vadd.f32 %v365, %v945
    %v947 = vpop.f32.mrb[0].mxu0
    %948 = vmatprep.mubr.f32.mxu0 0.0
    %949 = vmatmul.mubr.f32.gmra.mrb[0].mxu0 %v601
    %v950 = vpop.f32.mrb[0].mxu0
    %v951 = vadd.f32 %v370, %v950
    %v952 = vpop.f32.mrb[0].mxu0
    %953 = vmatprep.mubr.f32.mxu0 0.0
    %954 = vmatmul.mubr.f32.gmra.mrb[0].mxu0 %v604
    %v955 = vpop.f32.mrb[0].mxu0
    %v956 = vadd.f32 %v375, %v955
    %v957 = vpop.f32.mrb[0].mxu0
    %958 = vmatprep.mubr.f32.mxu0 0.0
    %959 = vmatmul.mubr.f32.gmra.mrb[0].mxu0 %v607
    %v960 = vpop.f32.mrb[0].mxu0
    %v961 = vadd.f32 %v380, %v960
    %v962 = vpop.f32.mrb[0].mxu0
    %963 = vmatprep.mubr.f32.mxu0 0.0
    %964 = vmatmul.mubr.f32.gmra.mrb[0].mxu0 %v610
    %v965 = vpop.f32.mrb[0].mxu0
    %v966 = vadd.f32 %v385, %v965
    %v967 = vpop.f32.mrb[0].mxu0
    %968 = vmatprep.mubr.f32.mxu0 0.0
    %969 = vmatmul.mubr.f32.gmra.mrb[0].mxu0 %v613
    %v970 = vpop.f32.mrb[0].mxu0
    %v971 = vadd.f32 %v390, %v970
    %v972 = vpop.f32.mrb[0].mxu0
    %973 = vmatprep.mubr.f32.mxu0 0.0
    %974 = vmatmul.mubr.f32.gmra.mrb[0].mxu0 %v616
    %v975 = vpop.f32.mrb[0].mxu0
    %v976 = vadd.f32 %v395, %v975
    %v977 = vpop.f32.mrb[0].mxu0
    %978 = vmatprep.mubr.f32.mxu0 0.0
    %979 = vmatmul.mubr.f32.gmra.mrb[0].mxu0 %v619
    %v980 = vpop.f32.mrb[0].mxu0
    %v981 = vadd.f32 %v400, %v980
    %v982 = vpop.f32.mrb[0].mxu0
    %983 = vmatprep.mubr.f32.mxu0 0.0
    %984 = vmatmul.mubr.f32.gmra.mrb[0].mxu0 %v622
    %v985 = vpop.f32.mrb[0].mxu0
    %v986 = vadd.f32 %v405, %v985
    %v987 = vpop.f32.mrb[0].mxu0
    %988 = vmatprep.mubr.f32.mxu0 0.0
    %989 = vmatmul.mubr.f32.gmra.mrb[0].mxu0 %v625
    %v990 = vpop.f32.mrb[0].mxu0
    %v991 = vadd.f32 %v410, %v990
    %v992 = vpop.f32.mrb[0].mxu0
    %993 = vmatprep.mubr.f32.mxu0 0.0
    %994 = vmatmul.mubr.f32.gmra.mrb[0].mxu0 %v628
    %v995 = vpop.f32.mrb[0].mxu0
    %v996 = vadd.f32 %v415, %v995
    %v997 = vpop.f32.mrb[0].mxu0
    %998 = vmatprep.mubr.f32.mxu0 0.0
    %999 = vmatmul.mubr.f32.gmra.mrb[0].mxu0 %v631
    %v1000 = vpop.f32.mrb[0].mxu0
    %v1001 = vadd.f32 %v420, %v1000
    %v1002 = vpop.f32.mrb[0].mxu0
    %1003 = vmatprep.mubr.f32.mxu0 0.0
    %1004 = vmatmul.mubr.f32.gmra.mrb[0].mxu0 %v634
    %v1005 = vpop.f32.mrb[0].mxu0
    %v1006 = vadd.f32 %v425, %v1005
    %v1007 = vpop.f32.mrb[0].mxu0
    %1008 = vmatprep.mubr.f32.mxu0 0.0
    %1009 = vmatmul.mubr.f32.gmra.mrb[0].mxu0 %v637
    %v1010 = vpop.f32.mrb[0].mxu0
    %v1011 = vadd.f32 %v430, %v1010
    %v1012 = vpop.f32.mrb[0].mxu0
    %1013 = vmatprep.mubr.f32.mxu0 0.0
    %1014 = vmatmul.mubr.f32.gmra.mrb[0].mxu0 %v640
    %v1015 = vpop.f32.mrb[0].mxu0
    %v1016 = vadd.f32 %v435, %v1015
    %v1017 = vpop.f32.mrb[0].mxu0
    %1018 = vmatprep.mubr.f32.mxu0 0.0
    %1019 = vmatmul.mubr.f32.gmra.mrb[0].mxu0 %v643
    %v1020 = vpop.f32.mrb[0].mxu0
    %v1021 = vadd.f32 %v440, %v1020
    %v1022 = vpop.f32.mrb[0].mxu0
    %1023 = vmatprep.mubr.f32.mxu0 0.0
    %1024 = vmatmul.mubr.f32.gmra.mrb[0].mxu0 %v646
    %v1025 = vpop.f32.mrb[0].mxu0
    %v1026 = vadd.f32 %v445, %v1025
    %v1027 = vpop.f32.mrb[0].mxu0
    %1028 = vmatprep.mubr.f32.mxu0 0.0
    %1029 = vmatmul.mubr.f32.gmra.mrb[0].mxu0 %v649
    %v1030 = vpop.f32.mrb[0].mxu0
    %v1031 = vadd.f32 %v450, %v1030
    %v1032 = vpop.f32.mrb[0].mxu0
    %1033 = vmatprep.mubr.f32.mxu0 0.0
    %1034 = vmatmul.mubr.f32.gmra.mrb[0].mxu0 %v652
    %v1035 = vpop.f32.mrb[0].mxu0
    %v1036 = vadd.f32 %v455, %v1035
    %v1037 = vpop.f32.mrb[0].mxu0
    %1038 = vmatprep.mubr.f32.mxu0 0.0
    %1039 = vmatmul.mubr.f32.gmra.mrb[0].mxu0 %v655
    %v1040 = vpop.f32.mrb[0].mxu0
    %v1041 = vadd.f32 %v460, %v1040
    %v1042 = vpop.f32.mrb[0].mxu0
    %1043 = vmatprep.mubr.f32.mxu0 0.0
    %1044 = vmatmul.mubr.f32.gmra.mrb[0].mxu0 %v658
    %v1045 = vpop.f32.mrb[0].mxu0
    %v1046 = vadd.f32 %v465, %v1045
    %v1047 = vpop.f32.mrb[0].mxu0
    %1048 = vdwg.mxu0
    %1049 = vst [vmem:[#allocation2] sm:$0xff] %v731
    %1050 = vst [vmem:[#allocation2 + $0x8] sm:$0xff] %v736
    %1051 = vst [vmem:[#allocation2 + $0x10] sm:$0xff] %v741
    %1052 = vst [vmem:[#allocation2 + $0x18] sm:$0xff] %v746
    %1053 = vst [vmem:[#allocation2 + $0x20] sm:$0xff] %v751
    %1054 = vst [vmem:[#allocation2 + $0x28] sm:$0xff] %v756
    %1055 = vst [vmem:[#allocation2 + $0x30] sm:$0xff] %v761
    %1056 = vst [vmem:[#allocation2 + $0x38] sm:$0xff] %v766
    %1057 = vst [vmem:[#allocation2 + $0x40] sm:$0xff] %v771
    %1058 = vst [vmem:[#allocation2 + $0x48] sm:$0xff] %v776
    %1059 = vst [vmem:[#allocation2 + $0x50] sm:$0xff] %v781
    %1060 = vst [vmem:[#allocation2 + $0x58] sm:$0xff] %v786
    %1061 = vst [vmem:[#allocation2 + $0x60] sm:$0xff] %v791
    %1062 = vst [vmem:[#allocation2 + $0x68] sm:$0xff] %v796
    %1063 = vst [vmem:[#allocation2 + $0x70] sm:$0xff] %v801
    %1064 = vst [vmem:[#allocation2 + $0x78] sm:$0xff] %v806
    %1065 = vst [vmem:[#allocation2 + $0x80] sm:$0xff] %v811
    %1066 = vst [vmem:[#allocation2 + $0x88] sm:$0xff] %v816
    %1067 = vst [vmem:[#allocation2 + $0x90] sm:$0xff] %v821
    %1068 = vst [vmem:[#allocation2 + $0x98] sm:$0xff] %v826
    %1069 = vst [vmem:[#allocation2 + $0xa0] sm:$0xff] %v831
    %1070 = vst [vmem:[#allocation2 + $0xa8] sm:$0xff] %v836
    %1071 = vst [vmem:[#allocation2 + $0xb0] sm:$0xff] %v841
    %1072 = vst [vmem:[#allocation2 + $0xb8] sm:$0xff] %v846
    %1073 = vst [vmem:[#allocation2 + $0xc0] sm:$0xff] %v851
    %1074 = vst [vmem:[#allocation2 + $0xc8] sm:$0xff] %v856
    %1075 = vst [vmem:[#allocation2 + $0xd0] sm:$0xff] %v861
    %1076 = vst [vmem:[#allocation2 + $0xd8] sm:$0xff] %v866
    %1077 = vst [vmem:[#allocation2 + $0xe0] sm:$0xff] %v871
    %1078 = vst [vmem:[#allocation2 + $0xe8] sm:$0xff] %v876
    %1079 = vst [vmem:[#allocation2 + $0xf0] sm:$0xff] %v881
    %1080 = vst [vmem:[#allocation2 + $0xf8] sm:$0xff] %v886
    %1081 = vst [vmem:[#allocation2 + $0x100] sm:$0xff] %v891
    %1082 = vst [vmem:[#allocation2 + $0x108] sm:$0xff] %v896
    %1083 = vst [vmem:[#allocation2 + $0x110] sm:$0xff] %v901
    %1084 = vst [vmem:[#allocation2 + $0x118] sm:$0xff] %v906
    %1085 = vst [vmem:[#allocation2 + $0x120] sm:$0xff] %v911
    %1086 = vst [vmem:[#allocation2 + $0x128] sm:$0xff] %v916
    %1087 = vst [vmem:[#allocation2 + $0x130] sm:$0xff] %v921
    %1088 = vst [vmem:[#allocation2 + $0x138] sm:$0xff] %v926
    %1089 = vst [vmem:[#allocation2 + $0x140] sm:$0xff] %v931
    %1090 = vst [vmem:[#allocation2 + $0x148] sm:$0xff] %v936
    %1091 = vst [vmem:[#allocation2 + $0x150] sm:$0xff] %v941
    %1092 = vst [vmem:[#allocation2 + $0x158] sm:$0xff] %v946
    %1093 = vst [vmem:[#allocation2 + $0x160] sm:$0xff] %v951
    %1094 = vst [vmem:[#allocation2 + $0x168] sm:$0xff] %v956
    %1095 = vst [vmem:[#allocation2 + $0x170] sm:$0xff] %v961
    %1096 = vst [vmem:[#allocation2 + $0x178] sm:$0xff] %v966
    %1097 = vst [vmem:[#allocation2 + $0x180] sm:$0xff] %v971
    %1098 = vst [vmem:[#allocation2 + $0x188] sm:$0xff] %v976
    %1099 = vst [vmem:[#allocation2 + $0x190] sm:$0xff] %v981
    %1100 = vst [vmem:[#allocation2 + $0x198] sm:$0xff] %v986
    %1101 = vst [vmem:[#allocation2 + $0x1a0] sm:$0xff] %v991
    %1102 = vst [vmem:[#allocation2 + $0x1a8] sm:$0xff] %v996
    %1103 = vst [vmem:[#allocation2 + $0x1b0] sm:$0xff] %v1001
    %1104 = vst [vmem:[#allocation2 + $0x1b8] sm:$0xff] %v1006
    %1105 = vst [vmem:[#allocation2 + $0x1c0] sm:$0xff] %v1011
    %1106 = vst [vmem:[#allocation2 + $0x1c8] sm:$0xff] %v1016
    %1107 = vst [vmem:[#allocation2 + $0x1d0] sm:$0xff] %v1021
    %1108 = vst [vmem:[#allocation2 + $0x1d8] sm:$0xff] %v1026
    %1109 = vst [vmem:[#allocation2 + $0x1e0] sm:$0xff] %v1031
    %1110 = vst [vmem:[#allocation2 + $0x1e8] sm:$0xff] %v1036
    %1111 = vst [vmem:[#allocation2 + $0x1f0] sm:$0xff] %v1041
    %1112 = vst [vmem:[#allocation2 + $0x1f8] sm:$0xff] %v1046
    // Predicated region
    $region14: #{tpu_custom_call.1} parent=1 // pred_check
      _
    $region15: #{tpu_custom_call.1} parent=1 // pred_check_branch
      %1114 = sbr.rel (0) target = $region17
    $region16: #{tpu_custom_call.1} parent=1 // pred_region
      %s1116 = ssub.s32 8192, 8192
      %1117 = vsyncadd [#allocation3], %s1116
      %s1118 = sshll.u32 [#allocation2], 4
      %s1119 = int_to_ptr.vmem [resolvable:$true] %s1118
      %1124 = dma.vmem_to_hbm [thread:$0]  %s1119, 8192, %s3, [#allocation3], 128, 128, 8
    $region17: #{tpu_custom_call.1} parent=1 // pred_fallthru
      _
    // Predicated region
    $region18: #{tpu_custom_call.1} parent=1 // pred_check
      _
    $region19: #{tpu_custom_call.1} parent=1 // pred_check_branch
      %1126 = sbr.rel (0) target = $region21
    $region20: #{tpu_custom_call.1} parent=1 // pred_region
      %1127 = dma.done [#allocation3], 8192
    $region21: #{tpu_custom_call.1} parent=1 // pred_fallthru
      _
    %1128 = vsyncpa [#allocation3], 1

</llo_original>
